<compile_context>
chip_gen: v5e
topology: v5e:2x2
jax: 0.10.0
libtpu: 0.0.40
codegen_flags: <defaults>
</compile_context>

<pallas_src>
import jax
import jax.numpy as jnp
from jax.experimental import pallas as pl
from jax.experimental.pallas import tpu as pltpu


def _round_up(x: int, m: int) -> int:
    return ((x + m - 1) // m) * m


def _mlp_kernel(x_ref, w1_ref, b1_ref, w2_ref, b2_ref, o_ref):
    # First matmul on the MXU: bf16 operands, f32 accumulation.
    x = x_ref[...].astype(jnp.bfloat16)
    w1 = w1_ref[...].astype(jnp.bfloat16)          # no-op if pre-cast to bf16
    h = jnp.dot(x, w1, preferred_element_type=jnp.float32)
    # Bias + ReLU in f32 on the VPU (v5e has no bf16 VPU path).
    h = jnp.maximum(h + b1_ref[...], 0.0)
    # Second matmul: bf16 operands, f32 accumulation.
    w2 = w2_ref[...].astype(jnp.bfloat16)
    o = jnp.dot(h.astype(jnp.bfloat16), w2, preferred_element_type=jnp.float32)
    # Store only the real d_out columns (masked vst; avoids write amplification).
    o_ref[...] = (o + b2_ref[...]).astype(o_ref.dtype)


def _pick_block_b(B: int) -> int:
    if B < 256:
        # Launch-bound regime: one (possibly clipped) block covering the batch.
        return B
    # Guarantee >=2 grid steps so both v7x TensorCores get batch work, while
    # growing tiles up to 2048 rows (256-multiples for the 256-wide MXU) to
    # amortize ~0.35us per-step pipeline overhead.
    mult = 256 if B >= 512 else 128
    return int(min(2048, _round_up(pl.cdiv(B, 2), mult)))


def _vmem_budget_bytes(block_b, d_in, h_dim, d_out, x_itemsize, w_itemsize) -> int:
    def tile(r, c, itemsize):
        # Conservative VMEM-tiled footprint estimate ((8,128) tiles, sublane-packed).
        return _round_up(max(r, 1), 16) * _round_up(max(c, 1), 128) * itemsize

    act = 2 * tile(block_b, d_in, x_itemsize)        # double-buffered x tile
    out = 2 * tile(block_b, d_out, 4)                # double-buffered out tile (f32)
    wgt = 2 * (tile(d_in, h_dim, w_itemsize) + tile(h_dim, d_out, w_itemsize)
               + tile(1, h_dim, 4) + tile(1, d_out, 4))
    footprint = act + out + wgt
    # Footprint + headroom for Mosaic internal scratch; keep at least the
    # platform default (32 MiB) and never ask for more than ~100 MiB
    # (v5e/v6e ceiling; anything past v7x's 64 MiB can't fit there anyway).
    return int(min(max(footprint + (8 << 20), 32 << 20), 100 << 20))


def policy_network_forward(x, w1, b1, w2, b2, *, block_b=None):
    """Fused forward pass of _PolicyNetwork: relu(x @ w1 + b1) @ w2 + b2.

    x : (B, input_dim)            float32 (or bfloat16)
    w1: (input_dim, hidden_dim)   float32 or bfloat16 (transpose of PyTorch layout)
    b1: (hidden_dim,) or (1, hidden_dim)
    w2: (hidden_dim, output_dim)  float32 or bfloat16
    b2: (output_dim,) or (1, output_dim)
    returns (B, output_dim) float32
    """
    B, d_in = x.shape
    d_in_w, h_dim = w1.shape
    h_dim2, d_out = w2.shape
    assert d_in == d_in_w and h_dim == h_dim2

    # Biases as (1, dim) f32 rows (no-op if already prepared).
    b1 = jnp.reshape(b1, (1, h_dim)).astype(jnp.float32)
    b2 = jnp.reshape(b2, (1, d_out)).astype(jnp.float32)

    if block_b is None:
        block_b = _pick_block_b(B)
    grid = (pl.cdiv(B, block_b),)

    vmem_limit = _vmem_budget_bytes(
        block_b, d_in, h_dim, d_out,
        jnp.dtype(x.dtype).itemsize, jnp.dtype(w1.dtype).itemsize)

    return pl.pallas_call(
        _mlp_kernel,
        out_shape=jax.ShapeDtypeStruct((B, d_out), jnp.float32),
        grid_spec=pltpu.PrefetchScalarGridSpec(
            num_scalar_prefetch=0,
            grid=grid,
            in_specs=[
                # Batch-tiled activations: pipelined across the grid.  The last
                # block is clipped by Pallas (no HBM batch padding).
                pl.BlockSpec((block_b, d_in), lambda i: (i, 0)),
                # Weights / biases: constant index_map -> VMEM-resident for the
                # whole batch sweep.  Full-array block dims: Mosaic pads in VMEM.
                pl.BlockSpec((d_in, h_dim), lambda i: (0, 0)),
                pl.BlockSpec((1, h_dim), lambda i: (0, 0)),
                pl.BlockSpec((h_dim, d_out), lambda i: (0, 0)),
                pl.BlockSpec((1, d_out), lambda i: (0, 0)),
            ],
            out_specs=pl.BlockSpec((block_b, d_out), lambda i: (i, 0)),
        ),
        compiler_params=pltpu.CompilerParams(
            dimension_semantics=("parallel",),   # megacore batch sharding (v7x)
            vmem_limit_bytes=vmem_limit,
        ),
    )(x, w1, b1, w2, b2)


def prepare_params(w1, b1, w2, b2):
    """One-time weight prep (cast/reshape) — cache the result across calls so the
    bf16 cast is not re-issued per forward (weights are static across rollouts)."""
    return (w1.astype(jnp.bfloat16),
            jnp.reshape(b1, (1, -1)).astype(jnp.float32),
            w2.astype(jnp.bfloat16),
            jnp.reshape(b2, (1, -1)).astype(jnp.float32))


def init_params(key, input_dim, hidden_dim, output_dim):
    """Deterministic init mimicking nn.Linear's uniform(-1/sqrt(fan_in), +)."""
    k1, k2, k3, k4 = jax.random.split(key, 4)
    lim1 = 1.0 / jnp.sqrt(jnp.float32(input_dim))
    lim2 = 1.0 / jnp.sqrt(jnp.float32(hidden_dim))
    w1 = jax.random.uniform(k1, (input_dim, hidden_dim), jnp.float32, -lim1, lim1)
    b1 = jax.random.uniform(k2, (hidden_dim,), jnp.float32, -lim1, lim1)
    w2 = jax.random.uniform(k3, (hidden_dim, output_dim), jnp.float32, -lim2, lim2)
    b2 = jax.random.uniform(k4, (output_dim,), jnp.float32, -lim2, lim2)
    return w1, b1, w2, b2


if __name__ == "__main__":
    input_dim, hidden_dim, output_dim = 16, 32, 4
    batch = 8

    key = jax.random.PRNGKey(0)
    kx, kp = jax.random.split(key)
    x = jax.random.normal(kx, (batch, input_dim), jnp.float32)
    w1, b1, w2, b2 = init_params(kp, input_dim, hidden_dim, output_dim)

    # One-time param prep (bf16 weights); callers cache this across rollout steps.
    params = prepare_params(w1, b1, w2, b2)

    out = policy_network_forward(x, *params)
    jax.block_until_ready(out)

    # Reference check in plain f32 JAX; tolerance loosened for bf16 matmuls.
    ref = jnp.maximum(x @ w1 + b1[None, :], 0.0) @ w2 + b2[None, :]
    assert out.shape == (batch, output_dim)
    assert jnp.allclose(out, ref, atol=5e-2, rtol=5e-2), (
        float(jnp.max(jnp.abs(out - ref)))
    )

    print("KERNEL_OK")
</pallas_src>

<mosaic_0001>
module attributes {stable_mosaic.version = 11 : i64} {
  func.func @_mlp_kernel(%arg0: i32, %arg1: memref<8x16xf32, #tpu.memory_space<vmem>>, %arg2: memref<16x32xbf16, #tpu.memory_space<vmem>>, %arg3: memref<1x32xf32, #tpu.memory_space<vmem>>, %arg4: memref<32x4xbf16, #tpu.memory_space<vmem>>, %arg5: memref<1x4xf32, #tpu.memory_space<vmem>>, %arg6: memref<8x4xf32, #tpu.memory_space<vmem>>) attributes {dimension_semantics = [#tpu.dimension_semantics<parallel>], iteration_bounds = array<i64: 1>, scalar_prefetch = 0 : i64, scratch_operands = 0 : i64, tpu.core_type = #tpu.core_type<tc>, window_params = [{transform_indices = @transform_0, window_bounds = array<i64: 8, 16>}, {pipeline_mode = #tpu.pipeline_mode<synchronous>, transform_indices = @transform_1, window_bounds = array<i64: 16, 32>}, {pipeline_mode = #tpu.pipeline_mode<synchronous>, transform_indices = @transform_2, window_bounds = array<i64: 1, 32>}, {pipeline_mode = #tpu.pipeline_mode<synchronous>, transform_indices = @transform_3, window_bounds = array<i64: 32, 4>}, {pipeline_mode = #tpu.pipeline_mode<synchronous>, transform_indices = @transform_4, window_bounds = array<i64: 1, 4>}, {transform_indices = @transform_5, window_bounds = array<i64: 8, 4>}]} {
    %c0 = arith.constant 0 : index
    %c0_0 = arith.constant 0 : index
    %0 = vector.load %arg1[%c0, %c0_0] : memref<8x16xf32, #tpu.memory_space<vmem>>, vector<8x16xf32>
    %1 = arith.truncf %0 : vector<8x16xf32> to vector<8x16xbf16>
    %c0_1 = arith.constant 0 : index
    %c0_2 = arith.constant 0 : index
    %2 = vector.load %arg2[%c0_1, %c0_2] : memref<16x32xbf16, #tpu.memory_space<vmem>>, vector<16x32xbf16>
    %cst = arith.constant dense<0.000000e+00> : vector<8x32xf32>
    %3 = tpu.matmul %1, %2, %cst {dimension_numbers = #tpu.dot_dimension_numbers<[1], [0], [0], [1], [0, 0, 1, 1], [], []>} : vector<8x16xbf16>, vector<16x32xbf16>, vector<8x32xf32> -> vector<8x32xf32>
    %c0_3 = arith.constant 0 : index
    %c0_4 = arith.constant 0 : index
    %4 = vector.load %arg3[%c0_3, %c0_4] : memref<1x32xf32, #tpu.memory_space<vmem>>, vector<1x32xf32>
    %5 = vector.broadcast %4 : vector<1x32xf32> to vector<8x32xf32>
    %6 = arith.addf %3, %5 : vector<8x32xf32>
    %cst_5 = arith.constant 0.000000e+00 : f32
    %7 = vector.broadcast %cst_5 : f32 to vector<8x32xf32>
    %8 = arith.maximumf %6, %7 : vector<8x32xf32>
    %c0_6 = arith.constant 0 : index
    %c0_7 = arith.constant 0 : index
    %9 = vector.load %arg4[%c0_6, %c0_7] : memref<32x4xbf16, #tpu.memory_space<vmem>>, vector<32x4xbf16>
    %10 = arith.truncf %8 : vector<8x32xf32> to vector<8x32xbf16>
    %cst_8 = arith.constant dense<0.000000e+00> : vector<8x4xf32>
    %11 = tpu.matmul %10, %9, %cst_8 {dimension_numbers = #tpu.dot_dimension_numbers<[1], [0], [0], [1], [0, 0, 1, 1], [], []>} : vector<8x32xbf16>, vector<32x4xbf16>, vector<8x4xf32> -> vector<8x4xf32>
    %c0_9 = arith.constant 0 : index
    %c0_10 = arith.constant 0 : index
    %12 = vector.load %arg5[%c0_9, %c0_10] : memref<1x4xf32, #tpu.memory_space<vmem>>, vector<1x4xf32>
    %13 = vector.broadcast %12 : vector<1x4xf32> to vector<8x4xf32>
    %14 = arith.addf %11, %13 : vector<8x4xf32>
    %c0_11 = arith.constant 0 : index
    %c0_12 = arith.constant 0 : index
    %15 = vector.load %arg6[%c0_11, %c0_12] : memref<8x4xf32, #tpu.memory_space<vmem>>, vector<8x4xf32>
    tpu.vector_store %arg6[%c0_11, %c0_12], %14 {strides = array<i32>} : memref<8x4xf32, #tpu.memory_space<vmem>>, vector<8x4xf32>,
    return
  }
  func.func @transform_0(%arg0: i32) -> (i32, i32) {
    %c0_i32 = arith.constant 0 : i32
    %c0_i32_0 = arith.constant 0 : i32
    return %arg0, %c0_i32 : i32, i32
  }
  func.func @transform_1(%arg0: i32) -> (i32, i32) {
    %c0_i32 = arith.constant 0 : i32
    %c0_i32_0 = arith.constant 0 : i32
    %c0_i32_1 = arith.constant 0 : i32
    return %c0_i32, %c0_i32_0 : i32, i32
  }
  func.func @transform_2(%arg0: i32) -> (i32, i32) {
    %c0_i32 = arith.constant 0 : i32
    %c0_i32_0 = arith.constant 0 : i32
    %c0_i32_1 = arith.constant 0 : i32
    return %c0_i32, %c0_i32_0 : i32, i32
  }
  func.func @transform_3(%arg0: i32) -> (i32, i32) {
    %c0_i32 = arith.constant 0 : i32
    %c0_i32_0 = arith.constant 0 : i32
    %c0_i32_1 = arith.constant 0 : i32
    return %c0_i32, %c0_i32_0 : i32, i32
  }
  func.func @transform_4(%arg0: i32) -> (i32, i32) {
    %c0_i32 = arith.constant 0 : i32
    %c0_i32_0 = arith.constant 0 : i32
    %c0_i32_1 = arith.constant 0 : i32
    return %c0_i32, %c0_i32_0 : i32, i32
  }
  func.func @transform_5(%arg0: i32) -> (i32, i32) {
    %c0_i32 = arith.constant 0 : i32
    %c0_i32_0 = arith.constant 0 : i32
    return %arg0, %c0_i32 : i32, i32
  }
}

</mosaic_0001>

<llo_original>
// kernel: tpu_custom_call.1
$region0: #{tpu_custom_call.1}
  #allocation0 [shape = 'u32[]', space=smem, size = 0x4, offset = 0x4, fixed_abs, tag = 'smem constant byte address 0x4 - core index']
  #allocation1 [shape = 'u32[72,128]{1,0:T(1,128)}', space=vmem, size = 0x9000, scoped, tag = 'internal scratch']
  %s0 = inlined_call_operand.vmem [shape: f32[8,16], index: 0, kind: input, shape index: {}]
  %s1 = inlined_call_operand.vmem [shape: bf16[16,32], index: 1, kind: input, shape index: {}]
  %s2 = inlined_call_operand.vmem [shape: f32[1,32], index: 2, kind: input, shape index: {}]
  %s3 = inlined_call_operand.vmem [shape: bf16[32,4], index: 3, kind: input, shape index: {}]
  %s4 = inlined_call_operand.vmem [shape: f32[1,4], index: 4, kind: input, shape index: {}]
  %s5 = inlined_call_operand.vmem [shape: f32[8,4], index: 5, kind: output, shape index: {}]
  %s6 = sld [smem:[#allocation0]]
  $region30: #{tpu_custom_call.1} parent=0
    _
  %s8 = ssub.s32 1, %s6
  %s9 = scalar_select 0, %s8, %s6
  // Predicated region
  $region2: #{tpu_custom_call.1} parent=0 // pred_check
    _
  $region3: #{tpu_custom_call.1} parent=0 // pred_check_branch
    %11 = sbr.rel (0) target = $region5
  $region4: #{tpu_custom_call.1} parent=0 // pred_region
    _
  $region5: #{tpu_custom_call.1} parent=0 // pred_fallthru
    _
  // Predicated region
  $region6: #{tpu_custom_call.1} parent=0 // pred_check
    _
  $region7: #{tpu_custom_call.1} parent=0 // pred_check_branch
    %13 = sbr.rel (0) target = $region9
  $region8: #{tpu_custom_call.1} parent=0 // pred_region
    _
  $region9: #{tpu_custom_call.1} parent=0 // pred_fallthru
    _
  // Predicated region
  $region10: #{tpu_custom_call.1} parent=0 // pred_check
    _
  $region11: #{tpu_custom_call.1} parent=0 // pred_check_branch
    %15 = sbr.rel (0) target = $region13
  $region12: #{tpu_custom_call.1} parent=0 // pred_region
    _
  $region13: #{tpu_custom_call.1} parent=0 // pred_fallthru
    _
  // Predicated region
  $region14: #{tpu_custom_call.1} parent=0 // pred_check
    _
  $region15: #{tpu_custom_call.1} parent=0 // pred_check_branch
    %17 = sbr.rel (0) target = $region17
  $region16: #{tpu_custom_call.1} parent=0 // pred_region
    _
  $region17: #{tpu_custom_call.1} parent=0 // pred_fallthru
    _
  // Predicated region
  $region18: #{tpu_custom_call.1} parent=0 // pred_check
    _
  $region19: #{tpu_custom_call.1} parent=0 // pred_check_branch
    %19 = sbr.rel (0) target = $region21
  $region20: #{tpu_custom_call.1} parent=0 // pred_region
    _
  $region21: #{tpu_custom_call.1} parent=0 // pred_fallthru
    _
  %v21 = vld [vmem:[%s0] sm:$0xff]
  %v22 = vpack.c.bf16 %v21, %v21
  %v23 = vld [vmem:[%s1] sm:$0xf]
  %v24 = vld [vmem:[%s1 + $0x4] sm:$0xf]
  %v25 = vld [vmem:[%s2] sm:$0x1]
  %v27 = vperm.slane %v25, 0
  %v31 = vunpack.c.l.b16 %v23
  %v32 = vunpack.c.l.b16 %v24
  %v33 = vpack.c.b16 %v32, %v31
  %vm35 = vcmask 130048
  %v37 = vsel %vm35, %v22, 0
  %39 = vmatpush.bf16.msra.mxu0 0
  %40 = vmatpush.bf16.msra.mxu0 0
  %41 = vmatpush.bf16.msra.mxu0 0
  %42 = vmatpush.bf16.msra.mxu0 0
  %43 = vmatpush.bf16.msra.mxu0 0
  %44 = vmatpush.bf16.msra.mxu0 0
  %45 = vmatpush.bf16.msra.mxu0 0
  %46 = vmatpush.bf16.msra.mxu0 %v33
  %47 = vmatmul.bf16.gmra.mxu0 %v37
  %v48 = vpop.f32.mrf.mxu0
  %v49 = vadd.f32 %v27, %v48
  %v50 = vpop.f32.mrf.mxu0
  %51 = vdwg.mxu0
  %v52 = vmax.f32 %v49, 0.0
  %v53 = vld [vmem:[%s3] sm:$0xf]
  %v54 = vld [vmem:[%s3 + $0x4] sm:$0xf]
  %v55 = vld [vmem:[%s3 + $0x8] sm:$0xf]
  %v56 = vld [vmem:[%s3 + $0xc] sm:$0xf]
  %v57 = vpack.c.bf16 %v52, %v52
  %v58 = vld [vmem:[%s4] sm:$0x1]
  %v60 = vperm.slane %v58, 0
  %v66 = vunpack.c.l.b16 %v53
  %v67 = vunpack.c.l.b16 %v54
  %v68 = vunpack.c.l.b16 %v55
  %v69 = vunpack.c.l.b16 %v56
  %v70 = vpack.c.b16 %v67, %v66
  %v71 = vpack.c.b16 %v69, %v68
  %vm74 = vcmask 261120
  %v76 = vsel %vm74, %v57, 0
  %78 = vmatpush.bf16.msra.mxu0 0
  %79 = vmatpush.bf16.msra.mxu0 0
  %80 = vmatpush.bf16.msra.mxu0 0
  %81 = vmatpush.bf16.msra.mxu0 0
  %82 = vmatpush.bf16.msra.mxu0 0
  %83 = vmatpush.bf16.msra.mxu0 0
  %84 = vmatpush.bf16.msra.mxu0 %v71
  %85 = vmatpush.bf16.msra.mxu0 %v70
  %86 = vmatmul.bf16.gmra.mxu0 %v76
  %v87 = vpop.f32.mrf.mxu0
  %v88 = vadd.f32 %v60, %v87
  %v89 = vpop.f32.mrf.mxu0
  %90 = vdwg.mxu0
  %vm91 = vcmask 31744
  %92 = vst.msk [vmem:[%s5] sm:$0xff] %vm91, %v88
  // Predicated region
  $region22: #{tpu_custom_call.1} parent=0 // pred_check
    _
  $region23: #{tpu_custom_call.1} parent=0 // pred_check_branch
    %94 = sbr.rel (0) target = $region25
  $region24: #{tpu_custom_call.1} parent=0 // pred_region
    _
  $region25: #{tpu_custom_call.1} parent=0 // pred_fallthru
    _
  // Predicated region
  $region26: #{tpu_custom_call.1} parent=0 // pred_check
    _
  $region27: #{tpu_custom_call.1} parent=0 // pred_check_branch
    %96 = sbr.rel (0) target = $region29
  $region28: #{tpu_custom_call.1} parent=0 // pred_region
    _
  $region29: #{tpu_custom_call.1} parent=0 // pred_fallthru
    _

</llo_original>
